<compile_context>
chip_gen: v5e
topology: v5e:2x2
jax: 0.10.0
libtpu: 0.0.40
codegen_flags: <defaults>
</compile_context>

<pallas_src>
import functools
import inspect

import jax
import jax.numpy as jnp
from jax import lax
from jax.experimental import pallas as pl
from jax.experimental.pallas import tpu as pltpu


def _supports_buffered():
    if not hasattr(pl, "Buffered"):
        return False
    try:
        return "pipeline_mode" in inspect.signature(pl.BlockSpec).parameters
    except (TypeError, ValueError):
        return False


_HAS_BUFFERED = _supports_buffered()


def _vmem_limit_bytes():
    """Generation-aware scoped-VMEM limit (~75% of physical per-core VMEM)."""
    cap = 64 * 1024 * 1024  # conservative fallback (v7x-sized)
    try:
        info = pltpu.get_tpu_info()
        cap = int(getattr(info, "vmem_capacity_bytes", cap)) or cap
    except Exception:
        pass
    if cap <= 0:
        cap = 64 * 1024 * 1024
    return int(cap * 3 // 4)          # 96 MiB on v5e/v6e (128), 48 MiB on v7x (64)


def _largest_divisor_leq(n, cap):
    cap = max(1, min(n, int(cap)))
    for d in range(cap, 0, -1):
        if n % d == 0:
            return d
    return 1


def _pick_hw_tile(hw, max_tile):
    """Pick an HW tile (multiple of 128) and the padded HW it evenly divides."""
    max_tile = max(128, (int(max_tile) // 128) * 128)
    if hw % 128 == 0:
        for cand in range(min(max_tile, hw), 127, -128):
            if hw % cand == 0:
                return cand, hw                     # exact divisor, no padding
    thw = min(max_tile, ((hw + 127) // 128) * 128)
    hw_padded = ((hw + thw - 1) // thw) * thw       # pad + masked pool instead of
    return thw, hw_padded                           # falling back to whole-image tiles


def _x_spec(block_shape, index_map, bufs):
    """x-tile BlockSpec, with 3-deep buffering for small tiles when supported."""
    if bufs > 2 and _HAS_BUFFERED:
        return pl.BlockSpec(block_shape, index_map, pipeline_mode=pl.Buffered(bufs))
    return pl.BlockSpec(block_shape, index_map)


# ----------------------------------------------------------------------------
# kernels
# ----------------------------------------------------------------------------

def _conv_bn_silu(x2d, wcf, shift_f32, mxu_dtype):
    """1x1 conv (BN scale folded into weight) + BN shift + SiLU, f32 result."""
    y = jnp.dot(wcf, x2d.astype(mxu_dtype), preferred_element_type=jnp.float32)
    y = y + shift_f32                               # (C2, 1) bias broadcast over lanes
    return y * jax.nn.sigmoid(y)                    # SiLU (EUP sigmoid)


def _se_single_pass_kernel(x_ref, wcf_ref, shift_ref, w1_ref, w2_ref, o_ref,
                           *, inv_hw, bblk, mxu_dtype):
    """Fused conv+BN+SiLU+SE for `bblk` whole images per grid step."""
    wcf = wcf_ref[...]
    shift = shift_ref[...].astype(jnp.float32)
    w1 = w1_ref[...]
    w2 = w2_ref[...]
    for b in range(bblk):                                           # static, <= 8
        a = _conv_bn_silu(x_ref[b], wcf, shift, mxu_dtype)          # (C2, HW) f32
        mean = jnp.sum(a, axis=-1, keepdims=True) * inv_hw          # (C2, 1)
        h = jnp.maximum(jnp.dot(w1, mean, preferred_element_type=jnp.float32), 0.0)
        g = jax.nn.sigmoid(jnp.dot(w2, h, preferred_element_type=jnp.float32))
        o_ref[b] = (a * g).astype(o_ref.dtype)      # single fused store per image


def _masked_pool_sum(a, c, t, *, thw, tiles_per_chunk, hw_valid):
    if hw_valid is not None:                        # padded lanes excluded from pool
        start = (c * tiles_per_chunk + t) * thw
        lane = lax.broadcasted_iota(jnp.int32, (1, thw), 1)
        a = jnp.where(start + lane < hw_valid, a, 0.0)
    return jnp.sum(a, axis=-1, keepdims=True)       # (C2, 1)


def _se_pool_kernel(x_ref, wcf_ref, shift_ref, psum_ref,
                    *, mxu_dtype, thw, tiles_per_chunk, hw_valid):
    """Tiled pass 1 (recompute flavor): accumulate per-image pool partial sums.
    Grid = (B, NC, Tc); NC is a parallel chunk axis (2nd v7x TensorCore)."""
    c = pl.program_id(1)
    t = pl.program_id(2)
    a = _conv_bn_silu(x_ref[0], wcf_ref[...], shift_ref[...].astype(jnp.float32),
                      mxu_dtype)                                    # (C2, thw) f32

    @pl.when(t == 0)
    def _():
        psum_ref[...] = jnp.zeros_like(psum_ref)

    s = _masked_pool_sum(a, c, t, thw=thw, tiles_per_chunk=tiles_per_chunk,
                         hw_valid=hw_valid)
    psum_ref[...] += s[None, None]


def _se_act_pool_kernel(x_ref, wcf_ref, shift_ref, a_ref, psum_ref,
                        *, mxu_dtype, thw, tiles_per_chunk, hw_valid):
    """Tiled pass 1 (store-activation flavor): write the unscaled activation tile
    and accumulate per-image pool partial sums."""
    c = pl.program_id(1)
    t = pl.program_id(2)
    a = _conv_bn_silu(x_ref[0], wcf_ref[...], shift_ref[...].astype(jnp.float32),
                      mxu_dtype)
    a_ref[0] = a.astype(a_ref.dtype)

    @pl.when(t == 0)
    def _():
        psum_ref[...] = jnp.zeros_like(psum_ref)

    s = _masked_pool_sum(a, c, t, thw=thw, tiles_per_chunk=tiles_per_chunk,
                         hw_valid=hw_valid)
    psum_ref[...] += s[None, None]


def _se_apply_kernel(x_ref, wcf_ref, shift_ref, g_ref, o_ref, *, mxu_dtype):
    """Tiled pass 2 (recompute flavor): conv+BN+SiLU for one tile, apply gate."""
    a = _conv_bn_silu(x_ref[0], wcf_ref[...], shift_ref[...].astype(jnp.float32),
                      mxu_dtype)
    o_ref[0] = (a * g_ref[0]).astype(o_ref.dtype)


def _se_rescale_kernel(a_ref, g_ref, o_ref):
    """Tiled pass 2 (store-activation flavor): pure elementwise gate rescale."""
    o_ref[0] = (a_ref[0].astype(jnp.float32) * g_ref[0]).astype(o_ref.dtype)


# ----------------------------------------------------------------------------
# wrapper
# ----------------------------------------------------------------------------

@functools.partial(
    jax.jit,
    static_argnames=("force_tiled", "max_hw_tile", "tiled_mode",
                     "use_bf16_matmul", "max_batch_block"))
def se_forward(x_nchw, wc, bn_gamma, bn_beta, bn_mean, bn_var, w1, w2,
               force_tiled=False, max_hw_tile=None, tiled_mode="auto",
               use_bf16_matmul=False, max_batch_block=8):
    eps = 1e-5
    B, C1, H, W = x_nchw.shape
    C2 = wc.shape[0]
    CR = w1.shape[0]
    HW = H * W
    itemsize = x_nchw.dtype.itemsize
    out_dtype = x_nchw.dtype

    bf16_mxu = bool(use_bf16_matmul) and x_nchw.dtype == jnp.float32
    mxu_dtype = jnp.bfloat16 if bf16_mxu else x_nchw.dtype
    mxu_itemsize = 2 if bf16_mxu else itemsize

    # Fold BN (inference) into the conv weight + a per-channel f32 shift.
    scale = bn_gamma.astype(jnp.float32) * lax.rsqrt(bn_var.astype(jnp.float32) + eps)
    wc_f = (wc.astype(jnp.float32) * scale[:, None]).astype(mxu_dtype)       # (C2, C1)
    shift = (bn_beta.astype(jnp.float32)
             - bn_mean.astype(jnp.float32) * scale).reshape(C2, 1)           # (C2, 1) f32
    w1f = w1.astype(jnp.float32)
    w2f = w2.astype(jnp.float32)

    # Channels-second layout: NCHW -> (B, C, HW) is a free reshape (no transpose).
    x = x_nchw.reshape(B, C1, HW)

    # Generation-aware VMEM policy.
    vmem_limit = _vmem_limit_bytes()
    budget = int(vmem_limit * 0.45)

    def cparams(sem):
        return pltpu.CompilerParams(dimension_semantics=sem,
                                    vmem_limit_bytes=vmem_limit)

    weight_bytes = (C2 * C1 * mxu_itemsize + C2 * 4 + CR * C2 * 4 + C2 * CR * 4)
    conv_flops = 2 * B * HW * C1 * C2
    ew_flops = 6 * B * HW * C2
    gate_flops = 4 * B * C2 * CR

    # Realistic single-pass per-image working set: double-buffered in/out blocks
    # plus ~3 live (C2, HW) f32 temporaries (y, a, a*g).
    per_img = 2 * (C1 + C2) * HW * itemsize + 3 * C2 * HW * 4
    use_tiled = bool(force_tiled) or (per_img + weight_bytes) > budget

    # ------------------------------ single pass ------------------------------
    if not use_tiled:
        bblk_cap = max(1, min(int(max_batch_block),
                              max(1, (budget - weight_bytes)) // max(per_img, 1)))
        bblk = _largest_divisor_leq(B, bblk_cap)
        out = pl.pallas_call(
            functools.partial(_se_single_pass_kernel, inv_hw=1.0 / HW,
                              bblk=bblk, mxu_dtype=mxu_dtype),
            out_shape=jax.ShapeDtypeStruct((B, C2, HW), out_dtype),
            grid_spec=pltpu.PrefetchScalarGridSpec(
                num_scalar_prefetch=0,
                grid=(B // bblk,),
                in_specs=[
                    pl.BlockSpec((bblk, C1, HW), lambda i: (i, 0, 0)),
                    pl.BlockSpec((C2, C1), lambda i: (0, 0)),
                    pl.BlockSpec((C2, 1), lambda i: (0, 0)),
                    pl.BlockSpec((CR, C2), lambda i: (0, 0)),
                    pl.BlockSpec((C2, CR), lambda i: (0, 0)),
                ],
                out_specs=pl.BlockSpec((bblk, C2, HW), lambda i: (i, 0, 0)),
            ),
            compiler_params=cparams(("parallel",)),
            cost_estimate=pl.CostEstimate(
                flops=conv_flops + ew_flops + gate_flops,
                transcendentals=B * HW * C2 + 2 * B * C2,
                bytes_accessed=B * C1 * HW * itemsize + B * C2 * HW * itemsize
                + weight_bytes),
        )(x, wc_f, shift, w1f, w2f)
        return out.reshape(B, C2, H, W)

    # ------------------------------ tiled path --------------------------------
    # Max tile from the VMEM budget (3-deep x buffers, 2-deep out, 3 f32 temps).
    per_lane = 3 * C1 * itemsize + 2 * C2 * itemsize + 3 * C2 * 4
    vmem_cap_tile = max(128, ((max(budget - weight_bytes, per_lane * 128))
                              // max(per_lane, 1)) // 128 * 128)
    cap = vmem_cap_tile if max_hw_tile is None else min(int(max_hw_tile), vmem_cap_tile)
    thw, hwp = _pick_hw_tile(HW, cap)
    T = hwp // thw
    hw_valid = HW if hwp != HW else None
    if hwp != HW:
        x = jnp.pad(x, ((0, 0), (0, 0), (0, hwp - HW)))

    # Split the pool reduction into 2 parallel chunks so both v7x TensorCores
    # get work even at B=1-2 (harmless on 1-TC v5e/v6e).
    nc = 2 if (T >= 2 and T % 2 == 0) else 1
    tc = T // nc

    # Flavor choice: re-run the conv in pass 2 ("recompute", x read twice) vs
    # store the activation and do a pure rescale pass ("rescale", extra
    # read+write of the (C2,HW) activation).  Pick rescale when the duplicated
    # conv FLOPs outweigh the extra HBM bytes (machine balance ~250 flop/byte).
    if tiled_mode == "auto":
        extra_bytes = max(0, 2 * C2 - C1) * itemsize
        store_act = (2 * C1 * C2) > 250 * extra_bytes
    else:
        store_act = (tiled_mode == "rescale")

    bufs_x = 3 if (C1 * thw * itemsize) <= (1 << 20) else 2

    kern_kwargs = dict(mxu_dtype=mxu_dtype, thw=thw, tiles_per_chunk=tc,
                       hw_valid=hw_valid)
    pool_in_specs = [
        _x_spec((1, C1, thw), lambda b, c, t, tc=tc: (b, 0, c * tc + t), bufs_x),
        pl.BlockSpec((C2, C1), lambda b, c, t: (0, 0)),
        pl.BlockSpec((C2, 1), lambda b, c, t: (0, 0)),
    ]
    psum_spec = pl.BlockSpec((1, 1, C2, 1), lambda b, c, t: (b, c, 0, 0))

    if store_act:
        act, psum = pl.pallas_call(
            functools.partial(_se_act_pool_kernel, **kern_kwargs),
            out_shape=(jax.ShapeDtypeStruct((B, C2, hwp), out_dtype),
                       jax.ShapeDtypeStruct((B, nc, C2, 1), jnp.float32)),
            grid_spec=pltpu.PrefetchScalarGridSpec(
                num_scalar_prefetch=0,
                grid=(B, nc, tc),
                in_specs=pool_in_specs,
                out_specs=(
                    pl.BlockSpec((1, C2, thw),
                                 lambda b, c, t, tc=tc: (b, 0, c * tc + t)),
                    psum_spec,
                ),
            ),
            compiler_params=cparams(("parallel", "parallel", "arbitrary")),
            cost_estimate=pl.CostEstimate(
                flops=conv_flops + ew_flops,
                transcendentals=B * hwp * C2,
                bytes_accessed=B * C1 * hwp * itemsize + B * C2 * hwp * itemsize
                + weight_bytes + B * nc * C2 * 4),
        )(x, wc_f, shift)
    else:
        psum = pl.pallas_call(
            functools.partial(_se_pool_kernel, **kern_kwargs),
            out_shape=jax.ShapeDtypeStruct((B, nc, C2, 1), jnp.float32),
            grid_spec=pltpu.PrefetchScalarGridSpec(
                num_scalar_prefetch=0,
                grid=(B, nc, tc),
                in_specs=pool_in_specs,
                out_specs=psum_spec,
            ),
            compiler_params=cparams(("parallel", "parallel", "arbitrary")),
            cost_estimate=pl.CostEstimate(
                flops=conv_flops + ew_flops,
                transcendentals=B * hwp * C2,
                bytes_accessed=B * C1 * hwp * itemsize + weight_bytes
                + B * nc * C2 * 4),
        )(x, wc_f, shift)

    # Tiny SE-gate MLP on the pooled means (B x C2): plain XLA, negligible cost.
    pool = jnp.sum(psum, axis=1)[..., 0] * (1.0 / HW)              # (B, C2) f32
    hidden = jnp.maximum(pool @ w1f.T, 0.0)
    gate = jax.nn.sigmoid(hidden @ w2f.T).reshape(B, C2, 1)        # (B, C2, 1) f32

    if store_act:
        out = pl.pallas_call(
            _se_rescale_kernel,
            out_shape=jax.ShapeDtypeStruct((B, C2, hwp), out_dtype),
            grid_spec=pltpu.PrefetchScalarGridSpec(
                num_scalar_prefetch=0,
                grid=(B, T),
                in_specs=[
                    pl.BlockSpec((1, C2, thw), lambda b, t: (b, 0, t)),
                    pl.BlockSpec((1, C2, 1), lambda b, t: (b, 0, 0)),
                ],
                out_specs=pl.BlockSpec((1, C2, thw), lambda b, t: (b, 0, t)),
            ),
            compiler_params=cparams(("parallel", "parallel")),
            input_output_aliases={0: 0},             # rescale the activation in place
            cost_estimate=pl.CostEstimate(
                flops=B * hwp * C2, transcendentals=0,
                bytes_accessed=2 * B * C2 * hwp * itemsize + B * C2 * 4),
        )(act, gate)
    else:
        out = pl.pallas_call(
            functools.partial(_se_apply_kernel, mxu_dtype=mxu_dtype),
            out_shape=jax.ShapeDtypeStruct((B, C2, hwp), out_dtype),
            grid_spec=pltpu.PrefetchScalarGridSpec(
                num_scalar_prefetch=0,
                grid=(B, T),
                in_specs=[
                    _x_spec((1, C1, thw), lambda b, t: (b, 0, t), bufs_x),
                    pl.BlockSpec((C2, C1), lambda b, t: (0, 0)),
                    pl.BlockSpec((C2, 1), lambda b, t: (0, 0)),
                    pl.BlockSpec((1, C2, 1), lambda b, t: (b, 0, 0)),
                ],
                out_specs=pl.BlockSpec((1, C2, thw), lambda b, t: (b, 0, t)),
            ),
            compiler_params=cparams(("parallel", "parallel")),
            cost_estimate=pl.CostEstimate(
                flops=conv_flops + ew_flops,
                transcendentals=B * hwp * C2,
                bytes_accessed=B * C1 * hwp * itemsize + B * C2 * hwp * itemsize
                + weight_bytes + B * C2 * 4),
        )(x, wc_f, shift, gate)

    if hwp != HW:
        out = out[:, :, :HW]
    return out.reshape(B, C2, H, W)


def reference_forward(x_nchw, wc, bn_gamma, bn_beta, bn_mean, bn_var, w1, w2):
    """Pure-JAX reference matching the PyTorch SE.forward (eval-mode BN)."""
    eps = 1e-5
    y = jnp.einsum("bchw,oc->bohw", x_nchw, wc)                    # 1x1 conv
    scale = (bn_gamma / jnp.sqrt(bn_var + eps)).reshape(1, -1, 1, 1)
    shift = (bn_beta - bn_mean * bn_gamma / jnp.sqrt(bn_var + eps)).reshape(1, -1, 1, 1)
    y = y * scale + shift                                          # BN (inference)
    a = y * jax.nn.sigmoid(y)                                      # SiLU
    p = jnp.mean(a, axis=(2, 3))                                   # (B, C2)
    h = jnp.maximum(p @ w1.T, 0.0)
    s = jax.nn.sigmoid(h @ w2.T)                                   # (B, C2)
    return a * s[:, :, None, None]


if __name__ == "__main__":
    key = jax.random.PRNGKey(0)
    k_x, k_wc, k_g, k_b, k_m, k_v, k_w1, k_w2 = jax.random.split(key, 8)

    B, C1, C2, H, W = 2, 16, 32, 16, 16
    REDUCTION = 16
    CR = max(C2 // REDUCTION, 1)                                   # 2

    x = jax.random.normal(k_x, (B, C1, H, W), dtype=jnp.float32)

    # deterministic parameter init (synthetic; shapes match the nn.Module)
    wc = jax.random.normal(k_wc, (C2, C1), dtype=jnp.float32) * 0.1      # Conv2d(C1,C2,1)
    bn_gamma = 1.0 + 0.1 * jax.random.normal(k_g, (C2,), dtype=jnp.float32)
    bn_beta = 0.1 * jax.random.normal(k_b, (C2,), dtype=jnp.float32)
    bn_mean = 0.1 * jax.random.normal(k_m, (C2,), dtype=jnp.float32)
    bn_var = jnp.abs(1.0 + 0.1 * jax.random.normal(k_v, (C2,), dtype=jnp.float32))
    w1 = jax.random.normal(k_w1, (CR, C2), dtype=jnp.float32) * 0.05     # Linear(C2, C2//16)
    w2 = jax.random.normal(k_w2, (C2, CR), dtype=jnp.float32) * 0.05     # Linear(C2//16, C2)

    ref = reference_forward(x, wc, bn_gamma, bn_beta, bn_mean, bn_var, w1, w2)

    # 1) default: fused single-pass path, several images per grid step.
    out = jax.block_until_ready(
        se_forward(x, wc, bn_gamma, bn_beta, bn_mean, bn_var, w1, w2))
    assert out.shape == (B, C2, H, W), out.shape
    assert jnp.allclose(out, ref, atol=1e-5, rtol=1e-5), float(jnp.max(jnp.abs(out - ref)))

    # 2) tiled path, recompute flavor (2-chunk parallel pool reduction).
    out_t = jax.block_until_ready(se_forward(
        x, wc, bn_gamma, bn_beta, bn_mean, bn_var, w1, w2,
        force_tiled=True, max_hw_tile=128, tiled_mode="recompute"))
    assert jnp.allclose(out_t, ref, atol=1e-5, rtol=1e-5), float(jnp.max(jnp.abs(out_t - ref)))

    # 3) tiled path, store-activation / rescale flavor (input_output_aliases).
    out_r = jax.block_until_ready(se_forward(
        x, wc, bn_gamma, bn_beta, bn_mean, bn_var, w1, w2,
        force_tiled=True, max_hw_tile=128, tiled_mode="rescale"))
    assert jnp.allclose(out_r, ref, atol=1e-5, rtol=1e-5), float(jnp.max(jnp.abs(out_r - ref)))

    # 4) awkward spatial size (HW not a multiple of 128) -> padded + masked pool.
    H2 = W2 = 10
    x2 = jax.random.normal(k_x, (B, C1, H2, W2), dtype=jnp.float32)
    ref2 = reference_forward(x2, wc, bn_gamma, bn_beta, bn_mean, bn_var, w1, w2)
    out2 = jax.block_until_ready(se_forward(
        x2, wc, bn_gamma, bn_beta, bn_mean, bn_var, w1, w2,
        force_tiled=True, max_hw_tile=128, tiled_mode="recompute"))
    assert jnp.allclose(out2, ref2, atol=1e-5, rtol=1e-5), float(jnp.max(jnp.abs(out2 - ref2)))

    # 5) bf16 MXU operands (v6e/v7x fast path) -- loose tolerance.
    out_b = jax.block_until_ready(se_forward(
        x, wc, bn_gamma, bn_beta, bn_mean, bn_var, w1, w2, use_bf16_matmul=True))
    assert jnp.allclose(out_b, ref, atol=5e-2, rtol=5e-2), float(jnp.max(jnp.abs(out_b - ref)))

    print("KERNEL_OK")
</pallas_src>

<mosaic_0001>
module attributes {stable_mosaic.version = 11 : i64} {
  func.func @_se_single_pass_kernel(%arg0: i32, %arg1: memref<2x16x256xf32, #tpu.memory_space<vmem>>, %arg2: memref<32x16xf32, #tpu.memory_space<vmem>>, %arg3: memref<32x1xf32, #tpu.memory_space<vmem>>, %arg4: memref<2x32xf32, #tpu.memory_space<vmem>>, %arg5: memref<32x2xf32, #tpu.memory_space<vmem>>, %arg6: memref<2x32x256xf32, #tpu.memory_space<vmem>>) attributes {dimension_semantics = [#tpu.dimension_semantics<parallel>], iteration_bounds = array<i64: 1>, scalar_prefetch = 0 : i64, scratch_operands = 0 : i64, tpu.core_type = #tpu.core_type<tc>, window_params = [{transform_indices = @transform_0, window_bounds = array<i64: 2, 16, 256>}, {pipeline_mode = #tpu.pipeline_mode<synchronous>, transform_indices = @transform_1, window_bounds = array<i64: 32, 16>}, {pipeline_mode = #tpu.pipeline_mode<synchronous>, transform_indices = @transform_2, window_bounds = array<i64: 32, 1>}, {pipeline_mode = #tpu.pipeline_mode<synchronous>, transform_indices = @transform_3, window_bounds = array<i64: 2, 32>}, {pipeline_mode = #tpu.pipeline_mode<synchronous>, transform_indices = @transform_4, window_bounds = array<i64: 32, 2>}, {transform_indices = @transform_5, window_bounds = array<i64: 2, 32, 256>}]} {
    %c0 = arith.constant 0 : index
    %c0_0 = arith.constant 0 : index
    %0 = vector.load %arg2[%c0, %c0_0] : memref<32x16xf32, #tpu.memory_space<vmem>>, vector<32x16xf32>
    %c0_1 = arith.constant 0 : index
    %c0_2 = arith.constant 0 : index
    %1 = vector.load %arg3[%c0_1, %c0_2] : memref<32x1xf32, #tpu.memory_space<vmem>>, vector<32x1xf32>
    %c0_3 = arith.constant 0 : index
    %c0_4 = arith.constant 0 : index
    %2 = vector.load %arg4[%c0_3, %c0_4] : memref<2x32xf32, #tpu.memory_space<vmem>>, vector<2x32xf32>
    %c0_5 = arith.constant 0 : index
    %c0_6 = arith.constant 0 : index
    %3 = vector.load %arg5[%c0_5, %c0_6] : memref<32x2xf32, #tpu.memory_space<vmem>>, vector<32x2xf32>
    %c0_7 = arith.constant 0 : index
    %c0_8 = arith.constant 0 : index
    %c0_9 = arith.constant 0 : index
    %4 = vector.load %arg1[%c0_7, %c0_8, %c0_9] : memref<2x16x256xf32, #tpu.memory_space<vmem>>, vector<1x16x256xf32>
    %5 = vector.shape_cast %4 : vector<1x16x256xf32> to vector<16x256xf32>
    %cst = arith.constant dense<0.000000e+00> : vector<32x256xf32>
    %6 = tpu.matmul %0, %5, %cst {dimension_numbers = #tpu.dot_dimension_numbers<[1], [0], [0], [1], [0, 0, 1, 1], [], []>} : vector<32x16xf32>, vector<16x256xf32>, vector<32x256xf32> -> vector<32x256xf32>
    %7 = vector.broadcast %1 : vector<32x1xf32> to vector<32x256xf32>
    %8 = arith.addf %6, %7 : vector<32x256xf32>
    %9 = arith.negf %8 : vector<32x256xf32>
    %10 = math.exp %9 : vector<32x256xf32>
    %cst_10 = arith.constant 1.000000e+00 : f32
    %11 = vector.broadcast %cst_10 : f32 to vector<32x256xf32>
    %12 = arith.addf %11, %10 : vector<32x256xf32>
    %13 = arith.divf %11, %12 : vector<32x256xf32>
    %14 = arith.mulf %8, %13 : vector<32x256xf32>
    %cst_11 = arith.constant dense<0.000000e+00> : vector<32xf32>
    %15 = vector.multi_reduction <add>, %14, %cst_11 [1] : vector<32x256xf32> to vector<32xf32>
    %16 = vector.shape_cast %15 : vector<32xf32> to vector<32x1xf32>
    %cst_12 = arith.constant 3.906250e-03 : f32
    %17 = vector.broadcast %cst_12 : f32 to vector<32x1xf32>
    %18 = arith.mulf %16, %17 : vector<32x1xf32>
    %cst_13 = arith.constant dense<0.000000e+00> : vector<2x1xf32>
    %19 = tpu.matmul %2, %18, %cst_13 {dimension_numbers = #tpu.dot_dimension_numbers<[1], [0], [0], [1], [0, 0, 1, 1], [], []>} : vector<2x32xf32>, vector<32x1xf32>, vector<2x1xf32> -> vector<2x1xf32>
    %cst_14 = arith.constant 0.000000e+00 : f32
    %20 = vector.broadcast %cst_14 : f32 to vector<2x1xf32>
    %21 = arith.maximumf %19, %20 : vector<2x1xf32>
    %cst_15 = arith.constant dense<0.000000e+00> : vector<32x1xf32>
    %22 = tpu.matmul %3, %21, %cst_15 {dimension_numbers = #tpu.dot_dimension_numbers<[1], [0], [0], [1], [0, 0, 1, 1], [], []>} : vector<32x2xf32>, vector<2x1xf32>, vector<32x1xf32> -> vector<32x1xf32>
    %23 = arith.negf %22 : vector<32x1xf32>
    %24 = math.exp %23 : vector<32x1xf32>
    %cst_16 = arith.constant 1.000000e+00 : f32
    %25 = vector.broadcast %cst_16 : f32 to vector<32x1xf32>
    %26 = arith.addf %25, %24 : vector<32x1xf32>
    %27 = arith.divf %25, %26 : vector<32x1xf32>
    %28 = vector.broadcast %27 : vector<32x1xf32> to vector<32x256xf32>
    %29 = arith.mulf %14, %28 : vector<32x256xf32>
    %c0_17 = arith.constant 0 : index
    %c0_18 = arith.constant 0 : index
    %c0_19 = arith.constant 0 : index
    %30 = vector.load %arg6[%c0_17, %c0_18, %c0_19] : memref<2x32x256xf32, #tpu.memory_space<vmem>>, vector<1x32x256xf32>
    %31 = vector.shape_cast %30 : vector<1x32x256xf32> to vector<32x256xf32>
    %32 = vector.shape_cast %29 : vector<32x256xf32> to vector<1x32x256xf32>
    tpu.vector_store %arg6[%c0_17, %c0_18, %c0_19], %32 {strides = array<i32>} : memref<2x32x256xf32, #tpu.memory_space<vmem>>, vector<1x32x256xf32>,
    %c1 = arith.constant 1 : index
    %c0_20 = arith.constant 0 : index
    %c0_21 = arith.constant 0 : index
    %33 = vector.load %arg1[%c1, %c0_20, %c0_21] : memref<2x16x256xf32, #tpu.memory_space<vmem>>, vector<1x16x256xf32>
    %34 = vector.shape_cast %33 : vector<1x16x256xf32> to vector<16x256xf32>
    %cst_22 = arith.constant dense<0.000000e+00> : vector<32x256xf32>
    %35 = tpu.matmul %0, %34, %cst_22 {dimension_numbers = #tpu.dot_dimension_numbers<[1], [0], [0], [1], [0, 0, 1, 1], [], []>} : vector<32x16xf32>, vector<16x256xf32>, vector<32x256xf32> -> vector<32x256xf32>
    %36 = vector.broadcast %1 : vector<32x1xf32> to vector<32x256xf32>
    %37 = arith.addf %35, %36 : vector<32x256xf32>
    %38 = arith.negf %37 : vector<32x256xf32>
    %39 = math.exp %38 : vector<32x256xf32>
    %cst_23 = arith.constant 1.000000e+00 : f32
    %40 = vector.broadcast %cst_23 : f32 to vector<32x256xf32>
    %41 = arith.addf %40, %39 : vector<32x256xf32>
    %42 = arith.divf %40, %41 : vector<32x256xf32>
    %43 = arith.mulf %37, %42 : vector<32x256xf32>
    %cst_24 = arith.constant dense<0.000000e+00> : vector<32xf32>
    %44 = vector.multi_reduction <add>, %43, %cst_24 [1] : vector<32x256xf32> to vector<32xf32>
    %45 = vector.shape_cast %44 : vector<32xf32> to vector<32x1xf32>
    %cst_25 = arith.constant 3.906250e-03 : f32
    %46 = vector.broadcast %cst_25 : f32 to vector<32x1xf32>
    %47 = arith.mulf %45, %46 : vector<32x1xf32>
    %cst_26 = arith.constant dense<0.000000e+00> : vector<2x1xf32>
    %48 = tpu.matmul %2, %47, %cst_26 {dimension_numbers = #tpu.dot_dimension_numbers<[1], [0], [0], [1], [0, 0, 1, 1], [], []>} : vector<2x32xf32>, vector<32x1xf32>, vector<2x1xf32> -> vector<2x1xf32>
    %cst_27 = arith.constant 0.000000e+00 : f32
    %49 = vector.broadcast %cst_27 : f32 to vector<2x1xf32>
    %50 = arith.maximumf %48, %49 : vector<2x1xf32>
    %cst_28 = arith.constant dense<0.000000e+00> : vector<32x1xf32>
    %51 = tpu.matmul %3, %50, %cst_28 {dimension_numbers = #tpu.dot_dimension_numbers<[1], [0], [0], [1], [0, 0, 1, 1], [], []>} : vector<32x2xf32>, vector<2x1xf32>, vector<32x1xf32> -> vector<32x1xf32>
    %52 = arith.negf %51 : vector<32x1xf32>
    %53 = math.exp %52 : vector<32x1xf32>
    %cst_29 = arith.constant 1.000000e+00 : f32
    %54 = vector.broadcast %cst_29 : f32 to vector<32x1xf32>
    %55 = arith.addf %54, %53 : vector<32x1xf32>
    %56 = arith.divf %54, %55 : vector<32x1xf32>
    %57 = vector.broadcast %56 : vector<32x1xf32> to vector<32x256xf32>
    %58 = arith.mulf %43, %57 : vector<32x256xf32>
    %c1_30 = arith.constant 1 : index
    %c0_31 = arith.constant 0 : index
    %c0_32 = arith.constant 0 : index
    %59 = vector.load %arg6[%c1_30, %c0_31, %c0_32] : memref<2x32x256xf32, #tpu.memory_space<vmem>>, vector<1x32x256xf32>
    %60 = vector.shape_cast %59 : vector<1x32x256xf32> to vector<32x256xf32>
    %61 = vector.shape_cast %58 : vector<32x256xf32> to vector<1x32x256xf32>
    tpu.vector_store %arg6[%c1_30, %c0_31, %c0_32], %61 {strides = array<i32>} : memref<2x32x256xf32, #tpu.memory_space<vmem>>, vector<1x32x256xf32>,
    return
  }
  func.func @transform_0(%arg0: i32) -> (i32, i32, i32) {
    %c0_i32 = arith.constant 0 : i32
    %c0_i32_0 = arith.constant 0 : i32
    %c0_i32_1 = arith.constant 0 : i32
    return %arg0, %c0_i32, %c0_i32_0 : i32, i32, i32
  }
  func.func @transform_1(%arg0: i32) -> (i32, i32) {
    %c0_i32 = arith.constant 0 : i32
    %c0_i32_0 = arith.constant 0 : i32
    %c0_i32_1 = arith.constant 0 : i32
    return %c0_i32, %c0_i32_0 : i32, i32
  }
  func.func @transform_2(%arg0: i32) -> (i32, i32) {
    %c0_i32 = arith.constant 0 : i32
    %c0_i32_0 = arith.constant 0 : i32
    %c0_i32_1 = arith.constant 0 : i32
    return %c0_i32, %c0_i32_0 : i32, i32
  }
  func.func @transform_3(%arg0: i32) -> (i32, i32) {
    %c0_i32 = arith.constant 0 : i32
    %c0_i32_0 = arith.constant 0 : i32
    %c0_i32_1 = arith.constant 0 : i32
    return %c0_i32, %c0_i32_0 : i32, i32
  }
  func.func @transform_4(%arg0: i32) -> (i32, i32) {
    %c0_i32 = arith.constant 0 : i32
    %c0_i32_0 = arith.constant 0 : i32
    %c0_i32_1 = arith.constant 0 : i32
    return %c0_i32, %c0_i32_0 : i32, i32
  }
  func.func @transform_5(%arg0: i32) -> (i32, i32, i32) {
    %c0_i32 = arith.constant 0 : i32
    %c0_i32_0 = arith.constant 0 : i32
    %c0_i32_1 = arith.constant 0 : i32
    return %arg0, %c0_i32, %c0_i32_0 : i32, i32, i32
  }
}

</mosaic_0001>

<llo_original>
// kernel: se_forward.1
$region0: #{se_forward.1}
  #allocation0 [shape = 'u32[]', space=smem, size = 0x4, offset = 0x4, fixed_abs, tag = 'smem constant byte address 0x4 - core index']
  #allocation1 [shape = 'u32[72,128]{1,0:T(1,128)}', space=vmem, size = 0x9000, scoped, tag = 'internal scratch']
  %s0 = inlined_call_operand.vmem [shape: f32[2,16,256], index: 0, kind: input, shape index: {}]
  %s1 = inlined_call_operand.vmem [shape: f32[32,16], index: 1, kind: input, shape index: {}]
  %s2 = inlined_call_operand.vmem [shape: f32[32,1], index: 2, kind: input, shape index: {}]
  %s3 = inlined_call_operand.vmem [shape: f32[2,32], index: 3, kind: input, shape index: {}]
  %s4 = inlined_call_operand.vmem [shape: f32[32,2], index: 4, kind: input, shape index: {}]
  %s5 = inlined_call_operand.vmem [shape: f32[2,32,256], index: 5, kind: output, shape index: {}]
  %s6 = sld [smem:[#allocation0]]
  $region30: #{se_forward.1} parent=0
    _
  %s8 = ssub.s32 1, %s6
  %s9 = scalar_select 0, %s8, %s6
  // Predicated region
  $region2: #{se_forward.1} parent=0 // pred_check
    _
  $region3: #{se_forward.1} parent=0 // pred_check_branch
    %11 = sbr.rel (0) target = $region5
  $region4: #{se_forward.1} parent=0 // pred_region
    _
  $region5: #{se_forward.1} parent=0 // pred_fallthru
    _
  // Predicated region
  $region6: #{se_forward.1} parent=0 // pred_check
    _
  $region7: #{se_forward.1} parent=0 // pred_check_branch
    %13 = sbr.rel (0) target = $region9
  $region8: #{se_forward.1} parent=0 // pred_region
    _
  $region9: #{se_forward.1} parent=0 // pred_fallthru
    _
  // Predicated region
  $region10: #{se_forward.1} parent=0 // pred_check
    _
  $region11: #{se_forward.1} parent=0 // pred_check_branch
    %15 = sbr.rel (0) target = $region13
  $region12: #{se_forward.1} parent=0 // pred_region
    _
  $region13: #{se_forward.1} parent=0 // pred_fallthru
    _
  // Predicated region
  $region14: #{se_forward.1} parent=0 // pred_check
    _
  $region15: #{se_forward.1} parent=0 // pred_check_branch
    %17 = sbr.rel (0) target = $region17
  $region16: #{se_forward.1} parent=0 // pred_region
    _
  $region17: #{se_forward.1} parent=0 // pred_fallthru
    _
  // Predicated region
  $region18: #{se_forward.1} parent=0 // pred_check
    _
  $region19: #{se_forward.1} parent=0 // pred_check_branch
    %19 = sbr.rel (0) target = $region21
  $region20: #{se_forward.1} parent=0 // pred_region
    _
  $region21: #{se_forward.1} parent=0 // pred_fallthru
    _
  %v20 = vld [vmem:[%s1] sm:$0xff]
  %v21 = vld [vmem:[%s1 + $0x8] sm:$0xff]
  %v22 = vld [vmem:[%s1 + $0x10] sm:$0xff]
  %v23 = vld [vmem:[%s1 + $0x18] sm:$0xff]
  %v24 = vld [vmem:[%s2] sm:$0xff]
  %v25 = vld [vmem:[%s2 + $0x8] sm:$0xff]
  %v26 = vld [vmem:[%s2 + $0x10] sm:$0xff]
  %v27 = vld [vmem:[%s2 + $0x18] sm:$0xff]
  %v28 = vld [vmem:[%s3] sm:$0x3]
  %v29 = vld [vmem:[%s4] sm:$0xff]
  %v30 = vld [vmem:[%s4 + $0x8] sm:$0xff]
  %v31 = vld [vmem:[%s4 + $0x10] sm:$0xff]
  %v32 = vld [vmem:[%s4 + $0x18] sm:$0xff]
  %v33 = vld [vmem:[%s0] sm:$0xff]
  %v34 = vld [vmem:[%s0 + $0x8] sm:$0xff]
  %v35 = vld [vmem:[%s0 + $0x10] sm:$0xff]
  %v36 = vld [vmem:[%s0 + $0x18] sm:$0xff]
  %38 = vset.pattern.permute.xlu0 0
  %39 = vperm.xlu0 %38, %v24
  %v40 = vpop.permute.xlu0 %39
  %43 = vset.pattern.permute.xlu0 0
  %44 = vperm.xlu0 %43, %v25
  %v45 = vpop.permute.xlu0 %44
  %48 = vset.pattern.permute.xlu0 0
  %49 = vperm.xlu0 %48, %v26
  %v50 = vpop.permute.xlu0 %49
  %53 = vset.pattern.permute.xlu0 0
  %54 = vperm.xlu0 %53, %v27
  %v55 = vpop.permute.xlu0 %54
  %vm57 = vcmask 130048
  %v59 = vsel %vm57, %v20, 0
  %v62 = vsel %vm57, %v21, 0
  %v65 = vsel %vm57, %v22, 0
  %v68 = vsel %vm57, %v23, 0
  %70 = vmatpush.msra.mxu0 0.0
  %71 = vmatpush.msra.mxu0 0.0
  %72 = vmatpush.msra.mxu0 0.0
  %73 = vmatpush.msra.mxu0 0.0
  %74 = vmatpush.msra.mxu0 0.0
  %75 = vmatpush.msra.mxu0 0.0
  %76 = vmatpush.msra.mxu0 0.0
  %77 = vmatpush.msra.mxu0 0.0
  %78 = vmatpush.msra.mxu0 0.0
  %79 = vmatpush.msra.mxu0 0.0
  %80 = vmatpush.msra.mxu0 0.0
  %81 = vmatpush.msra.mxu0 0.0
  %82 = vmatpush.msra.mxu0 0.0
  %83 = vmatpush.msra.mxu0 0.0
  %84 = vmatpush.msra.mxu0 %v35
  %85 = vmatpush.msra.mxu0 %v33
  %86 = vmatmul.f32.gmra.mxu0 %v59
  %v87 = vpop.f32.mrf.mxu0
  %v88 = vadd.f32 %v40, %v87
  %89 = vmatmul.f32.gmra.mxu0 %v62
  %v90 = vpop.f32.mrf.mxu0
  %v91 = vadd.f32 %v45, %v90
  %92 = vmatmul.f32.gmra.mxu0 %v65
  %v93 = vpop.f32.mrf.mxu0
  %v94 = vadd.f32 %v50, %v93
  %95 = vmatmul.f32.gmra.mxu0 %v68
  %v96 = vpop.f32.mrf.mxu0
  %v97 = vadd.f32 %v55, %v96
  %98 = vdwg.mxu0
  %99 = vmatpush.msra.mxu0 0.0
  %100 = vmatpush.msra.mxu0 0.0
  %101 = vmatpush.msra.mxu0 0.0
  %102 = vmatpush.msra.mxu0 0.0
  %103 = vmatpush.msra.mxu0 0.0
  %104 = vmatpush.msra.mxu0 0.0
  %105 = vmatpush.msra.mxu0 0.0
  %106 = vmatpush.msra.mxu0 0.0
  %107 = vmatpush.msra.mxu0 0.0
  %108 = vmatpush.msra.mxu0 0.0
  %109 = vmatpush.msra.mxu0 0.0
  %110 = vmatpush.msra.mxu0 0.0
  %111 = vmatpush.msra.mxu0 0.0
  %112 = vmatpush.msra.mxu0 0.0
  %113 = vmatpush.msra.mxu0 %v36
  %114 = vmatpush.msra.mxu0 %v34
  %115 = vmatmul.f32.gmra.mxu0 %v59
  %v116 = vpop.f32.mrf.mxu0
  %v117 = vadd.f32 %v40, %v116
  %118 = vmatmul.f32.gmra.mxu0 %v62
  %v119 = vpop.f32.mrf.mxu0
  %v120 = vadd.f32 %v45, %v119
  %121 = vmatmul.f32.gmra.mxu0 %v65
  %v122 = vpop.f32.mrf.mxu0
  %v123 = vadd.f32 %v50, %v122
  %124 = vmatmul.f32.gmra.mxu0 %v68
  %v125 = vpop.f32.mrf.mxu0
  %v126 = vadd.f32 %v55, %v125
  %127 = vdwg.mxu0
  %v128 = vxor.u32 %v88, 2147483648
  %v129 = vxor.u32 %v117, 2147483648
  %v130 = vxor.u32 %v91, 2147483648
  %v131 = vxor.u32 %v120, 2147483648
  %v132 = vxor.u32 %v94, 2147483648
  %v133 = vxor.u32 %v123, 2147483648
  %v134 = vxor.u32 %v97, 2147483648
  %v135 = vxor.u32 %v126, 2147483648
  %v136 = vmul.f32 %v128, 1.442695
  %v137 = vpow.pop %v136
  %v138 = vmul.f32 %v129, 1.442695
  %v139 = vpow.pop %v138
  %v140 = vmul.f32 %v130, 1.442695
  %v141 = vpow.pop %v140
  %v142 = vmul.f32 %v131, 1.442695
  %v143 = vpow.pop %v142
  %v144 = vmul.f32 %v132, 1.442695
  %v145 = vpow.pop %v144
  %v146 = vmul.f32 %v133, 1.442695
  %v147 = vpow.pop %v146
  %v148 = vmul.f32 %v134, 1.442695
  %v149 = vpow.pop %v148
  %v150 = vmul.f32 %v135, 1.442695
  %v151 = vpow.pop %v150
  %v152 = vadd.f32 %v137, 1.0
  %v153 = vadd.f32 %v139, 1.0
  %v154 = vadd.f32 %v141, 1.0
  %v155 = vadd.f32 %v143, 1.0
  %v156 = vadd.f32 %v145, 1.0
  %v157 = vadd.f32 %v147, 1.0
  %v158 = vadd.f32 %v149, 1.0
  %v159 = vadd.f32 %v151, 1.0
  %v160 = vrcp.pop %v152
  %v161 = vmul.f32 %v152, %v160
  %v162 = vsub.f32 1.0, %v161
  %v163 = vmul.f32 %v160, %v162
  %v164 = vadd.f32 %v160, %v163
  %vm165 = vweird.f32 %v152
  %vm166 = vweird.f32 %v160
  %vm167 = vmor %vm165, %vm166
  %v168 = vsel %vm167, %v160, %v164
  %v169 = vand.u32 2147483647, %v152
  %vm170 = vcmp.eq.f32.partialorder %v169, 8.507059e+37
  %v171 = vand.u32 %v152, 2147483648
  %v172 = vor.u32 1.1754944e-38, %v171
  %v173 = vsel %vm170, %v172, %v168
  %v174 = vmul.f32 1.0, %v173
  %v175 = vrcp.pop %v153
  %v176 = vmul.f32 %v153, %v175
  %v177 = vsub.f32 1.0, %v176
  %v178 = vmul.f32 %v175, %v177
  %v179 = vadd.f32 %v175, %v178
  %vm180 = vweird.f32 %v153
  %vm181 = vweird.f32 %v175
  %vm182 = vmor %vm180, %vm181
  %v183 = vsel %vm182, %v175, %v179
  %v184 = vand.u32 2147483647, %v153
  %vm185 = vcmp.eq.f32.partialorder %v184, 8.507059e+37
  %v186 = vand.u32 %v153, 2147483648
  %v187 = vor.u32 1.1754944e-38, %v186
  %v188 = vsel %vm185, %v187, %v183
  %v189 = vmul.f32 1.0, %v188
  %v190 = vrcp.pop %v154
  %v191 = vmul.f32 %v154, %v190
  %v192 = vsub.f32 1.0, %v191
  %v193 = vmul.f32 %v190, %v192
  %v194 = vadd.f32 %v190, %v193
  %vm195 = vweird.f32 %v154
  %vm196 = vweird.f32 %v190
  %vm197 = vmor %vm195, %vm196
  %v198 = vsel %vm197, %v190, %v194
  %v199 = vand.u32 2147483647, %v154
  %vm200 = vcmp.eq.f32.partialorder %v199, 8.507059e+37
  %v201 = vand.u32 %v154, 2147483648
  %v202 = vor.u32 1.1754944e-38, %v201
  %v203 = vsel %vm200, %v202, %v198
  %v204 = vmul.f32 1.0, %v203
  %v205 = vrcp.pop %v155
  %v206 = vmul.f32 %v155, %v205
  %v207 = vsub.f32 1.0, %v206
  %v208 = vmul.f32 %v205, %v207
  %v209 = vadd.f32 %v205, %v208
  %vm210 = vweird.f32 %v155
  %vm211 = vweird.f32 %v205
  %vm212 = vmor %vm210, %vm211
  %v213 = vsel %vm212, %v205, %v209
  %v214 = vand.u32 2147483647, %v155
  %vm215 = vcmp.eq.f32.partialorder %v214, 8.507059e+37
  %v216 = vand.u32 %v155, 2147483648
  %v217 = vor.u32 1.1754944e-38, %v216
  %v218 = vsel %vm215, %v217, %v213
  %v219 = vmul.f32 1.0, %v218
  %v220 = vrcp.pop %v156
  %v221 = vmul.f32 %v156, %v220
  %v222 = vsub.f32 1.0, %v221
  %v223 = vmul.f32 %v220, %v222
  %v224 = vadd.f32 %v220, %v223
  %vm225 = vweird.f32 %v156
  %vm226 = vweird.f32 %v220
  %vm227 = vmor %vm225, %vm226
  %v228 = vsel %vm227, %v220, %v224
  %v229 = vand.u32 2147483647, %v156
  %vm230 = vcmp.eq.f32.partialorder %v229, 8.507059e+37
  %v231 = vand.u32 %v156, 2147483648
  %v232 = vor.u32 1.1754944e-38, %v231
  %v233 = vsel %vm230, %v232, %v228
  %v234 = vmul.f32 1.0, %v233
  %v235 = vrcp.pop %v157
  %v236 = vmul.f32 %v157, %v235
  %v237 = vsub.f32 1.0, %v236
  %v238 = vmul.f32 %v235, %v237
  %v239 = vadd.f32 %v235, %v238
  %vm240 = vweird.f32 %v157
  %vm241 = vweird.f32 %v235
  %vm242 = vmor %vm240, %vm241
  %v243 = vsel %vm242, %v235, %v239
  %v244 = vand.u32 2147483647, %v157
  %vm245 = vcmp.eq.f32.partialorder %v244, 8.507059e+37
  %v246 = vand.u32 %v157, 2147483648
  %v247 = vor.u32 1.1754944e-38, %v246
  %v248 = vsel %vm245, %v247, %v243
  %v249 = vmul.f32 1.0, %v248
  %v250 = vrcp.pop %v158
  %v251 = vmul.f32 %v158, %v250
  %v252 = vsub.f32 1.0, %v251
  %v253 = vmul.f32 %v250, %v252
  %v254 = vadd.f32 %v250, %v253
  %vm255 = vweird.f32 %v158
  %vm256 = vweird.f32 %v250
  %vm257 = vmor %vm255, %vm256
  %v258 = vsel %vm257, %v250, %v254
  %v259 = vand.u32 2147483647, %v158
  %vm260 = vcmp.eq.f32.partialorder %v259, 8.507059e+37
  %v261 = vand.u32 %v158, 2147483648
  %v262 = vor.u32 1.1754944e-38, %v261
  %v263 = vsel %vm260, %v262, %v258
  %v264 = vmul.f32 1.0, %v263
  %v265 = vrcp.pop %v159
  %v266 = vmul.f32 %v159, %v265
  %v267 = vsub.f32 1.0, %v266
  %v268 = vmul.f32 %v265, %v267
  %v269 = vadd.f32 %v265, %v268
  %vm270 = vweird.f32 %v159
  %vm271 = vweird.f32 %v265
  %vm272 = vmor %vm270, %vm271
  %v273 = vsel %vm272, %v265, %v269
  %v274 = vand.u32 2147483647, %v159
  %vm275 = vcmp.eq.f32.partialorder %v274, 8.507059e+37
  %v276 = vand.u32 %v159, 2147483648
  %v277 = vor.u32 1.1754944e-38, %v276
  %v278 = vsel %vm275, %v277, %v273
  %v279 = vmul.f32 1.0, %v278
  %v280 = vmul.f32 %v88, %v174
  %v281 = vmul.f32 %v117, %v189
  %v282 = vmul.f32 %v91, %v204
  %v283 = vmul.f32 %v120, %v219
  %v284 = vmul.f32 %v94, %v234
  %v285 = vmul.f32 %v123, %v249
  %v286 = vmul.f32 %v97, %v264
  %v287 = vmul.f32 %v126, %v279
  %v288 = vadd.f32 %v280, %v281
  %289 = vadd.xlane.f32.xlu0 %v288
  %v290 = vpop.xlane.xlu0 %289
  %v291 = vadd.f32 %v282, %v283
  %292 = vadd.xlane.f32.xlu0 %v291
  %v293 = vpop.xlane.xlu0 %292
  %v294 = vadd.f32 %v284, %v285
  %295 = vadd.xlane.f32.xlu0 %v294
  %v296 = vpop.xlane.xlu0 %295
  %v297 = vadd.f32 %v286, %v287
  %298 = vadd.xlane.f32.xlu0 %v297
  %v299 = vpop.xlane.xlu0 %298
  %v300 = vmul.f32 %v290, 0.00390625
  %v301 = vmul.f32 %v293, 0.00390625
  %v302 = vmul.f32 %v296, 0.00390625
  %v303 = vmul.f32 %v299, 0.00390625
  %vm304 = vcmask 261120
  %v306 = vsel %vm304, %v28, 0
  %308 = vmatpush.msra.mxu0 0.0
  %309 = vmatpush.msra.mxu0 0.0
  %310 = vmatpush.msra.mxu0 0.0
  %311 = vmatpush.msra.mxu0 0.0
  %312 = vmatpush.msra.mxu0 0.0
  %313 = vmatpush.msra.mxu0 0.0
  %314 = vmatpush.msra.mxu0 0.0
  %315 = vmatpush.msra.mxu0 0.0
  %316 = vmatpush.msra.mxu0 0.0
  %317 = vmatpush.msra.mxu0 0.0
  %318 = vmatpush.msra.mxu0 0.0
  %319 = vmatpush.msra.mxu0 0.0
  %320 = vmatpush.msra.mxu0 %v303
  %321 = vmatpush.msra.mxu0 %v302
  %322 = vmatpush.msra.mxu0 %v301
  %323 = vmatpush.msra.mxu0 %v300
  %324 = vmatmul.f32.gmra.mxu0 %v306
  %v325 = vpop.f32.mrf.mxu0
  %v326 = vadd.f32 0.0, %v325
  %327 = vdwg.mxu0
  %v328 = vmax.f32 %v326, 0.0
  %vm329 = vcmask 15360
  %v331 = vsel %vm329, %v29, 0
  %v334 = vsel %vm329, %v30, 0
  %v337 = vsel %vm329, %v31, 0
  %v340 = vsel %vm329, %v32, 0
  %vm342 = vcmask 1041408
  %v344 = vsel %vm342, %v328, 0
  %346 = vmatpush.msra.mxu0 0.0
  %347 = vmatpush.msra.mxu0 0.0
  %348 = vmatpush.msra.mxu0 0.0
  %349 = vmatpush.msra.mxu0 0.0
  %350 = vmatpush.msra.mxu0 0.0
  %351 = vmatpush.msra.mxu0 0.0
  %352 = vmatpush.msra.mxu0 0.0
  %353 = vmatpush.msra.mxu0 0.0
  %354 = vmatpush.msra.mxu0 0.0
  %355 = vmatpush.msra.mxu0 0.0
  %356 = vmatpush.msra.mxu0 0.0
  %357 = vmatpush.msra.mxu0 0.0
  %358 = vmatpush.msra.mxu0 0.0
  %359 = vmatpush.msra.mxu0 0.0
  %360 = vmatpush.msra.mxu0 0.0
  %361 = vmatpush.msra.mxu0 %v344
  %362 = vmatmul.f32.gmra.mxu0 %v331
  %v363 = vpop.f32.mrf.mxu0
  %v364 = vadd.f32 0.0, %v363
  %365 = vmatmul.f32.gmra.mxu0 %v334
  %v366 = vpop.f32.mrf.mxu0
  %v367 = vadd.f32 0.0, %v366
  %368 = vmatmul.f32.gmra.mxu0 %v337
  %v369 = vpop.f32.mrf.mxu0
  %v370 = vadd.f32 0.0, %v369
  %371 = vmatmul.f32.gmra.mxu0 %v340
  %v372 = vpop.f32.mrf.mxu0
  %v373 = vadd.f32 0.0, %v372
  %374 = vdwg.mxu0
  %v375 = vxor.u32 %v364, 2147483648
  %v376 = vxor.u32 %v367, 2147483648
  %v377 = vxor.u32 %v370, 2147483648
  %v378 = vxor.u32 %v373, 2147483648
  %v379 = vmul.f32 %v375, 1.442695
  %v380 = vpow.pop %v379
  %v381 = vmul.f32 %v376, 1.442695
  %v382 = vpow.pop %v381
  %v383 = vmul.f32 %v377, 1.442695
  %v384 = vpow.pop %v383
  %v385 = vmul.f32 %v378, 1.442695
  %v386 = vpow.pop %v385
  %v387 = vadd.f32 %v380, 1.0
  %v388 = vadd.f32 %v382, 1.0
  %v389 = vadd.f32 %v384, 1.0
  %v390 = vadd.f32 %v386, 1.0
  %v391 = vrcp.pop %v387
  %v392 = vmul.f32 %v387, %v391
  %v393 = vsub.f32 1.0, %v392
  %v394 = vmul.f32 %v391, %v393
  %v395 = vadd.f32 %v391, %v394
  %vm396 = vweird.f32 %v387
  %vm397 = vweird.f32 %v391
  %vm398 = vmor %vm396, %vm397
  %v399 = vsel %vm398, %v391, %v395
  %v400 = vand.u32 2147483647, %v387
  %vm401 = vcmp.eq.f32.partialorder %v400, 8.507059e+37
  %v402 = vand.u32 %v387, 2147483648
  %v403 = vor.u32 1.1754944e-38, %v402
  %v404 = vsel %vm401, %v403, %v399
  %v405 = vmul.f32 1.0, %v404
  %v406 = vrcp.pop %v388
  %v407 = vmul.f32 %v388, %v406
  %v408 = vsub.f32 1.0, %v407
  %v409 = vmul.f32 %v406, %v408
  %v410 = vadd.f32 %v406, %v409
  %vm411 = vweird.f32 %v388
  %vm412 = vweird.f32 %v406
  %vm413 = vmor %vm411, %vm412
  %v414 = vsel %vm413, %v406, %v410
  %v415 = vand.u32 2147483647, %v388
  %vm416 = vcmp.eq.f32.partialorder %v415, 8.507059e+37
  %v417 = vand.u32 %v388, 2147483648
  %v418 = vor.u32 1.1754944e-38, %v417
  %v419 = vsel %vm416, %v418, %v414
  %v420 = vmul.f32 1.0, %v419
  %v421 = vrcp.pop %v389
  %v422 = vmul.f32 %v389, %v421
  %v423 = vsub.f32 1.0, %v422
  %v424 = vmul.f32 %v421, %v423
  %v425 = vadd.f32 %v421, %v424
  %vm426 = vweird.f32 %v389
  %vm427 = vweird.f32 %v421
  %vm428 = vmor %vm426, %vm427
  %v429 = vsel %vm428, %v421, %v425
  %v430 = vand.u32 2147483647, %v389
  %vm431 = vcmp.eq.f32.partialorder %v430, 8.507059e+37
  %v432 = vand.u32 %v389, 2147483648
  %v433 = vor.u32 1.1754944e-38, %v432
  %v434 = vsel %vm431, %v433, %v429
  %v435 = vmul.f32 1.0, %v434
  %v436 = vrcp.pop %v390
  %v437 = vmul.f32 %v390, %v436
  %v438 = vsub.f32 1.0, %v437
  %v439 = vmul.f32 %v436, %v438
  %v440 = vadd.f32 %v436, %v439
  %vm441 = vweird.f32 %v390
  %vm442 = vweird.f32 %v436
  %vm443 = vmor %vm441, %vm442
  %v444 = vsel %vm443, %v436, %v440
  %v445 = vand.u32 2147483647, %v390
  %vm446 = vcmp.eq.f32.partialorder %v445, 8.507059e+37
  %v447 = vand.u32 %v390, 2147483648
  %v448 = vor.u32 1.1754944e-38, %v447
  %v449 = vsel %vm446, %v448, %v444
  %v450 = vmul.f32 1.0, %v449
  %452 = vset.pattern.permute.xlu0 0
  %453 = vperm.xlu0 %452, %v405
  %v454 = vpop.permute.xlu0 %453
  %457 = vset.pattern.permute.xlu0 0
  %458 = vperm.xlu0 %457, %v420
  %v459 = vpop.permute.xlu0 %458
  %462 = vset.pattern.permute.xlu0 0
  %463 = vperm.xlu0 %462, %v435
  %v464 = vpop.permute.xlu0 %463
  %467 = vset.pattern.permute.xlu0 0
  %468 = vperm.xlu0 %467, %v450
  %v469 = vpop.permute.xlu0 %468
  %v471 = vmul.f32 %v280, %v454
  %v472 = vmul.f32 %v281, %v454
  %v473 = vmul.f32 %v282, %v459
  %v474 = vmul.f32 %v283, %v459
  %v475 = vmul.f32 %v284, %v464
  %v476 = vmul.f32 %v285, %v464
  %v477 = vmul.f32 %v286, %v469
  %v478 = vmul.f32 %v287, %v469
  %479 = vst [vmem:[%s5] sm:$0xff] %v471
  %480 = vst [vmem:[%s5 + $0x8] sm:$0xff] %v472
  %481 = vst [vmem:[%s5 + $0x10] sm:$0xff] %v473
  %482 = vst [vmem:[%s5 + $0x18] sm:$0xff] %v474
  %483 = vst [vmem:[%s5 + $0x20] sm:$0xff] %v475
  %484 = vst [vmem:[%s5 + $0x28] sm:$0xff] %v476
  %485 = vst [vmem:[%s5 + $0x30] sm:$0xff] %v477
  %486 = vst [vmem:[%s5 + $0x38] sm:$0xff] %v478
  %s487 = scalar_lea.vmem %s0, 32
  %v488 = vld [vmem:[%s487] sm:$0xff]
  %v489 = vld [vmem:[%s487 + $0x8] sm:$0xff]
  %v490 = vld [vmem:[%s487 + $0x10] sm:$0xff]
  %v491 = vld [vmem:[%s487 + $0x18] sm:$0xff]
  %492 = vmatpush.msra.mxu0 0.0
  %493 = vmatpush.msra.mxu0 0.0
  %494 = vmatpush.msra.mxu0 0.0
  %495 = vmatpush.msra.mxu0 0.0
  %496 = vmatpush.msra.mxu0 0.0
  %497 = vmatpush.msra.mxu0 0.0
  %498 = vmatpush.msra.mxu0 0.0
  %499 = vmatpush.msra.mxu0 0.0
  %500 = vmatpush.msra.mxu0 0.0
  %501 = vmatpush.msra.mxu0 0.0
  %502 = vmatpush.msra.mxu0 0.0
  %503 = vmatpush.msra.mxu0 0.0
  %504 = vmatpush.msra.mxu0 0.0
  %505 = vmatpush.msra.mxu0 0.0
  %506 = vmatpush.msra.mxu0 %v490
  %507 = vmatpush.msra.mxu0 %v488
  %508 = vmatmul.f32.gmra.mxu0 %v59
  %v509 = vpop.f32.mrf.mxu0
  %v510 = vadd.f32 %v40, %v509
  %511 = vmatmul.f32.gmra.mxu0 %v62
  %v512 = vpop.f32.mrf.mxu0
  %v513 = vadd.f32 %v45, %v512
  %514 = vmatmul.f32.gmra.mxu0 %v65
  %v515 = vpop.f32.mrf.mxu0
  %v516 = vadd.f32 %v50, %v515
  %517 = vmatmul.f32.gmra.mxu0 %v68
  %v518 = vpop.f32.mrf.mxu0
  %v519 = vadd.f32 %v55, %v518
  %520 = vdwg.mxu0
  %521 = vmatpush.msra.mxu0 0.0
  %522 = vmatpush.msra.mxu0 0.0
  %523 = vmatpush.msra.mxu0 0.0
  %524 = vmatpush.msra.mxu0 0.0
  %525 = vmatpush.msra.mxu0 0.0
  %526 = vmatpush.msra.mxu0 0.0
  %527 = vmatpush.msra.mxu0 0.0
  %528 = vmatpush.msra.mxu0 0.0
  %529 = vmatpush.msra.mxu0 0.0
  %530 = vmatpush.msra.mxu0 0.0
  %531 = vmatpush.msra.mxu0 0.0
  %532 = vmatpush.msra.mxu0 0.0
  %533 = vmatpush.msra.mxu0 0.0
  %534 = vmatpush.msra.mxu0 0.0
  %535 = vmatpush.msra.mxu0 %v491
  %536 = vmatpush.msra.mxu0 %v489
  %537 = vmatmul.f32.gmra.mxu0 %v59
  %v538 = vpop.f32.mrf.mxu0
  %v539 = vadd.f32 %v40, %v538
  %540 = vmatmul.f32.gmra.mxu0 %v62
  %v541 = vpop.f32.mrf.mxu0
  %v542 = vadd.f32 %v45, %v541
  %543 = vmatmul.f32.gmra.mxu0 %v65
  %v544 = vpop.f32.mrf.mxu0
  %v545 = vadd.f32 %v50, %v544
  %546 = vmatmul.f32.gmra.mxu0 %v68
  %v547 = vpop.f32.mrf.mxu0
  %v548 = vadd.f32 %v55, %v547
  %549 = vdwg.mxu0
  %v550 = vxor.u32 %v510, 2147483648
  %v551 = vxor.u32 %v539, 2147483648
  %v552 = vxor.u32 %v513, 2147483648
  %v553 = vxor.u32 %v542, 2147483648
  %v554 = vxor.u32 %v516, 2147483648
  %v555 = vxor.u32 %v545, 2147483648
  %v556 = vxor.u32 %v519, 2147483648
  %v557 = vxor.u32 %v548, 2147483648
  %v558 = vmul.f32 %v550, 1.442695
  %v559 = vpow.pop %v558
  %v560 = vmul.f32 %v551, 1.442695
  %v561 = vpow.pop %v560
  %v562 = vmul.f32 %v552, 1.442695
  %v563 = vpow.pop %v562
  %v564 = vmul.f32 %v553, 1.442695
  %v565 = vpow.pop %v564
  %v566 = vmul.f32 %v554, 1.442695
  %v567 = vpow.pop %v566
  %v568 = vmul.f32 %v555, 1.442695
  %v569 = vpow.pop %v568
  %v570 = vmul.f32 %v556, 1.442695
  %v571 = vpow.pop %v570
  %v572 = vmul.f32 %v557, 1.442695
  %v573 = vpow.pop %v572
  %v574 = vadd.f32 %v559, 1.0
  %v575 = vadd.f32 %v561, 1.0
  %v576 = vadd.f32 %v563, 1.0
  %v577 = vadd.f32 %v565, 1.0
  %v578 = vadd.f32 %v567, 1.0
  %v579 = vadd.f32 %v569, 1.0
  %v580 = vadd.f32 %v571, 1.0
  %v581 = vadd.f32 %v573, 1.0
  %v582 = vrcp.pop %v574
  %v583 = vmul.f32 %v574, %v582
  %v584 = vsub.f32 1.0, %v583
  %v585 = vmul.f32 %v582, %v584
  %v586 = vadd.f32 %v582, %v585
  %vm587 = vweird.f32 %v574
  %vm588 = vweird.f32 %v582
  %vm589 = vmor %vm587, %vm588
  %v590 = vsel %vm589, %v582, %v586
  %v591 = vand.u32 2147483647, %v574
  %vm592 = vcmp.eq.f32.partialorder %v591, 8.507059e+37
  %v593 = vand.u32 %v574, 2147483648
  %v594 = vor.u32 1.1754944e-38, %v593
  %v595 = vsel %vm592, %v594, %v590
  %v596 = vmul.f32 1.0, %v595
  %v597 = vrcp.pop %v575
  %v598 = vmul.f32 %v575, %v597
  %v599 = vsub.f32 1.0, %v598
  %v600 = vmul.f32 %v597, %v599
  %v601 = vadd.f32 %v597, %v600
  %vm602 = vweird.f32 %v575
  %vm603 = vweird.f32 %v597
  %vm604 = vmor %vm602, %vm603
  %v605 = vsel %vm604, %v597, %v601
  %v606 = vand.u32 2147483647, %v575
  %vm607 = vcmp.eq.f32.partialorder %v606, 8.507059e+37
  %v608 = vand.u32 %v575, 2147483648
  %v609 = vor.u32 1.1754944e-38, %v608
  %v610 = vsel %vm607, %v609, %v605
  %v611 = vmul.f32 1.0, %v610
  %v612 = vrcp.pop %v576
  %v613 = vmul.f32 %v576, %v612
  %v614 = vsub.f32 1.0, %v613
  %v615 = vmul.f32 %v612, %v614
  %v616 = vadd.f32 %v612, %v615
  %vm617 = vweird.f32 %v576
  %vm618 = vweird.f32 %v612
  %vm619 = vmor %vm617, %vm618
  %v620 = vsel %vm619, %v612, %v616
  %v621 = vand.u32 2147483647, %v576
  %vm622 = vcmp.eq.f32.partialorder %v621, 8.507059e+37
  %v623 = vand.u32 %v576, 2147483648
  %v624 = vor.u32 1.1754944e-38, %v623
  %v625 = vsel %vm622, %v624, %v620
  %v626 = vmul.f32 1.0, %v625
  %v627 = vrcp.pop %v577
  %v628 = vmul.f32 %v577, %v627
  %v629 = vsub.f32 1.0, %v628
  %v630 = vmul.f32 %v627, %v629
  %v631 = vadd.f32 %v627, %v630
  %vm632 = vweird.f32 %v577
  %vm633 = vweird.f32 %v627
  %vm634 = vmor %vm632, %vm633
  %v635 = vsel %vm634, %v627, %v631
  %v636 = vand.u32 2147483647, %v577
  %vm637 = vcmp.eq.f32.partialorder %v636, 8.507059e+37
  %v638 = vand.u32 %v577, 2147483648
  %v639 = vor.u32 1.1754944e-38, %v638
  %v640 = vsel %vm637, %v639, %v635
  %v641 = vmul.f32 1.0, %v640
  %v642 = vrcp.pop %v578
  %v643 = vmul.f32 %v578, %v642
  %v644 = vsub.f32 1.0, %v643
  %v645 = vmul.f32 %v642, %v644
  %v646 = vadd.f32 %v642, %v645
  %vm647 = vweird.f32 %v578
  %vm648 = vweird.f32 %v642
  %vm649 = vmor %vm647, %vm648
  %v650 = vsel %vm649, %v642, %v646
  %v651 = vand.u32 2147483647, %v578
  %vm652 = vcmp.eq.f32.partialorder %v651, 8.507059e+37
  %v653 = vand.u32 %v578, 2147483648
  %v654 = vor.u32 1.1754944e-38, %v653
  %v655 = vsel %vm652, %v654, %v650
  %v656 = vmul.f32 1.0, %v655
  %v657 = vrcp.pop %v579
  %v658 = vmul.f32 %v579, %v657
  %v659 = vsub.f32 1.0, %v658
  %v660 = vmul.f32 %v657, %v659
  %v661 = vadd.f32 %v657, %v660
  %vm662 = vweird.f32 %v579
  %vm663 = vweird.f32 %v657
  %vm664 = vmor %vm662, %vm663
  %v665 = vsel %vm664, %v657, %v661
  %v666 = vand.u32 2147483647, %v579
  %vm667 = vcmp.eq.f32.partialorder %v666, 8.507059e+37
  %v668 = vand.u32 %v579, 2147483648
  %v669 = vor.u32 1.1754944e-38, %v668
  %v670 = vsel %vm667, %v669, %v665
  %v671 = vmul.f32 1.0, %v670
  %v672 = vrcp.pop %v580
  %v673 = vmul.f32 %v580, %v672
  %v674 = vsub.f32 1.0, %v673
  %v675 = vmul.f32 %v672, %v674
  %v676 = vadd.f32 %v672, %v675
  %vm677 = vweird.f32 %v580
  %vm678 = vweird.f32 %v672
  %vm679 = vmor %vm677, %vm678
  %v680 = vsel %vm679, %v672, %v676
  %v681 = vand.u32 2147483647, %v580
  %vm682 = vcmp.eq.f32.partialorder %v681, 8.507059e+37
  %v683 = vand.u32 %v580, 2147483648
  %v684 = vor.u32 1.1754944e-38, %v683
  %v685 = vsel %vm682, %v684, %v680
  %v686 = vmul.f32 1.0, %v685
  %v687 = vrcp.pop %v581
  %v688 = vmul.f32 %v581, %v687
  %v689 = vsub.f32 1.0, %v688
  %v690 = vmul.f32 %v687, %v689
  %v691 = vadd.f32 %v687, %v690
  %vm692 = vweird.f32 %v581
  %vm693 = vweird.f32 %v687
  %vm694 = vmor %vm692, %vm693
  %v695 = vsel %vm694, %v687, %v691
  %v696 = vand.u32 2147483647, %v581
  %vm697 = vcmp.eq.f32.partialorder %v696, 8.507059e+37
  %v698 = vand.u32 %v581, 2147483648
  %v699 = vor.u32 1.1754944e-38, %v698
  %v700 = vsel %vm697, %v699, %v695
  %v701 = vmul.f32 1.0, %v700
  %v702 = vmul.f32 %v510, %v596
  %v703 = vmul.f32 %v539, %v611
  %v704 = vmul.f32 %v513, %v626
  %v705 = vmul.f32 %v542, %v641
  %v706 = vmul.f32 %v516, %v656
  %v707 = vmul.f32 %v545, %v671
  %v708 = vmul.f32 %v519, %v686
  %v709 = vmul.f32 %v548, %v701
  %v710 = vadd.f32 %v702, %v703
  %711 = vadd.xlane.f32.xlu0 %v710
  %v712 = vpop.xlane.xlu0 %711
  %v713 = vadd.f32 %v704, %v705
  %714 = vadd.xlane.f32.xlu0 %v713
  %v715 = vpop.xlane.xlu0 %714
  %v716 = vadd.f32 %v706, %v707
  %717 = vadd.xlane.f32.xlu0 %v716
  %v718 = vpop.xlane.xlu0 %717
  %v719 = vadd.f32 %v708, %v709
  %720 = vadd.xlane.f32.xlu0 %v719
  %v721 = vpop.xlane.xlu0 %720
  %v722 = vmul.f32 %v712, 0.00390625
  %v723 = vmul.f32 %v715, 0.00390625
  %v724 = vmul.f32 %v718, 0.00390625
  %v725 = vmul.f32 %v721, 0.00390625
  %726 = vmatpush.msra.mxu0 0.0
  %727 = vmatpush.msra.mxu0 0.0
  %728 = vmatpush.msra.mxu0 0.0
  %729 = vmatpush.msra.mxu0 0.0
  %730 = vmatpush.msra.mxu0 0.0
  %731 = vmatpush.msra.mxu0 0.0
  %732 = vmatpush.msra.mxu0 0.0
  %733 = vmatpush.msra.mxu0 0.0
  %734 = vmatpush.msra.mxu0 0.0
  %735 = vmatpush.msra.mxu0 0.0
  %736 = vmatpush.msra.mxu0 0.0
  %737 = vmatpush.msra.mxu0 0.0
  %738 = vmatpush.msra.mxu0 %v725
  %739 = vmatpush.msra.mxu0 %v724
  %740 = vmatpush.msra.mxu0 %v723
  %741 = vmatpush.msra.mxu0 %v722
  %742 = vmatmul.f32.gmra.mxu0 %v306
  %v743 = vpop.f32.mrf.mxu0
  %v744 = vadd.f32 0.0, %v743
  %745 = vdwg.mxu0
  %v746 = vmax.f32 %v744, 0.0
  %v748 = vsel %vm342, %v746, 0
  %750 = vmatpush.msra.mxu0 0.0
  %751 = vmatpush.msra.mxu0 0.0
  %752 = vmatpush.msra.mxu0 0.0
  %753 = vmatpush.msra.mxu0 0.0
  %754 = vmatpush.msra.mxu0 0.0
  %755 = vmatpush.msra.mxu0 0.0
  %756 = vmatpush.msra.mxu0 0.0
  %757 = vmatpush.msra.mxu0 0.0
  %758 = vmatpush.msra.mxu0 0.0
  %759 = vmatpush.msra.mxu0 0.0
  %760 = vmatpush.msra.mxu0 0.0
  %761 = vmatpush.msra.mxu0 0.0
  %762 = vmatpush.msra.mxu0 0.0
  %763 = vmatpush.msra.mxu0 0.0
  %764 = vmatpush.msra.mxu0 0.0
  %765 = vmatpush.msra.mxu0 %v748
  %766 = vmatmul.f32.gmra.mxu0 %v331
  %v767 = vpop.f32.mrf.mxu0
  %v768 = vadd.f32 0.0, %v767
  %769 = vmatmul.f32.gmra.mxu0 %v334
  %v770 = vpop.f32.mrf.mxu0
  %v771 = vadd.f32 0.0, %v770
  %772 = vmatmul.f32.gmra.mxu0 %v337
  %v773 = vpop.f32.mrf.mxu0
  %v774 = vadd.f32 0.0, %v773
  %775 = vmatmul.f32.gmra.mxu0 %v340
  %v776 = vpop.f32.mrf.mxu0
  %v777 = vadd.f32 0.0, %v776
  %778 = vdwg.mxu0
  %v779 = vxor.u32 %v768, 2147483648
  %v780 = vxor.u32 %v771, 2147483648
  %v781 = vxor.u32 %v774, 2147483648
  %v782 = vxor.u32 %v777, 2147483648
  %v783 = vmul.f32 %v779, 1.442695
  %v784 = vpow.pop %v783
  %v785 = vmul.f32 %v780, 1.442695
  %v786 = vpow.pop %v785
  %v787 = vmul.f32 %v781, 1.442695
  %v788 = vpow.pop %v787
  %v789 = vmul.f32 %v782, 1.442695
  %v790 = vpow.pop %v789
  %v791 = vadd.f32 %v784, 1.0
  %v792 = vadd.f32 %v786, 1.0
  %v793 = vadd.f32 %v788, 1.0
  %v794 = vadd.f32 %v790, 1.0
  %v795 = vrcp.pop %v791
  %v796 = vmul.f32 %v791, %v795
  %v797 = vsub.f32 1.0, %v796
  %v798 = vmul.f32 %v795, %v797
  %v799 = vadd.f32 %v795, %v798
  %vm800 = vweird.f32 %v791
  %vm801 = vweird.f32 %v795
  %vm802 = vmor %vm800, %vm801
  %v803 = vsel %vm802, %v795, %v799
  %v804 = vand.u32 2147483647, %v791
  %vm805 = vcmp.eq.f32.partialorder %v804, 8.507059e+37
  %v806 = vand.u32 %v791, 2147483648
  %v807 = vor.u32 1.1754944e-38, %v806
  %v808 = vsel %vm805, %v807, %v803
  %v809 = vmul.f32 1.0, %v808
  %v810 = vrcp.pop %v792
  %v811 = vmul.f32 %v792, %v810
  %v812 = vsub.f32 1.0, %v811
  %v813 = vmul.f32 %v810, %v812
  %v814 = vadd.f32 %v810, %v813
  %vm815 = vweird.f32 %v792
  %vm816 = vweird.f32 %v810
  %vm817 = vmor %vm815, %vm816
  %v818 = vsel %vm817, %v810, %v814
  %v819 = vand.u32 2147483647, %v792
  %vm820 = vcmp.eq.f32.partialorder %v819, 8.507059e+37
  %v821 = vand.u32 %v792, 2147483648
  %v822 = vor.u32 1.1754944e-38, %v821
  %v823 = vsel %vm820, %v822, %v818
  %v824 = vmul.f32 1.0, %v823
  %v825 = vrcp.pop %v793
  %v826 = vmul.f32 %v793, %v825
  %v827 = vsub.f32 1.0, %v826
  %v828 = vmul.f32 %v825, %v827
  %v829 = vadd.f32 %v825, %v828
  %vm830 = vweird.f32 %v793
  %vm831 = vweird.f32 %v825
  %vm832 = vmor %vm830, %vm831
  %v833 = vsel %vm832, %v825, %v829
  %v834 = vand.u32 2147483647, %v793
  %vm835 = vcmp.eq.f32.partialorder %v834, 8.507059e+37
  %v836 = vand.u32 %v793, 2147483648
  %v837 = vor.u32 1.1754944e-38, %v836
  %v838 = vsel %vm835, %v837, %v833
  %v839 = vmul.f32 1.0, %v838
  %v840 = vrcp.pop %v794
  %v841 = vmul.f32 %v794, %v840
  %v842 = vsub.f32 1.0, %v841
  %v843 = vmul.f32 %v840, %v842
  %v844 = vadd.f32 %v840, %v843
  %vm845 = vweird.f32 %v794
  %vm846 = vweird.f32 %v840
  %vm847 = vmor %vm845, %vm846
  %v848 = vsel %vm847, %v840, %v844
  %v849 = vand.u32 2147483647, %v794
  %vm850 = vcmp.eq.f32.partialorder %v849, 8.507059e+37
  %v851 = vand.u32 %v794, 2147483648
  %v852 = vor.u32 1.1754944e-38, %v851
  %v853 = vsel %vm850, %v852, %v848
  %v854 = vmul.f32 1.0, %v853
  %856 = vset.pattern.permute.xlu0 0
  %857 = vperm.xlu0 %856, %v809
  %v858 = vpop.permute.xlu0 %857
  %861 = vset.pattern.permute.xlu0 0
  %862 = vperm.xlu0 %861, %v824
  %v863 = vpop.permute.xlu0 %862
  %866 = vset.pattern.permute.xlu0 0
  %867 = vperm.xlu0 %866, %v839
  %v868 = vpop.permute.xlu0 %867
  %871 = vset.pattern.permute.xlu0 0
  %872 = vperm.xlu0 %871, %v854
  %v873 = vpop.permute.xlu0 %872
  %v875 = vmul.f32 %v702, %v858
  %v876 = vmul.f32 %v703, %v858
  %v877 = vmul.f32 %v704, %v863
  %v878 = vmul.f32 %v705, %v863
  %v879 = vmul.f32 %v706, %v868
  %v880 = vmul.f32 %v707, %v868
  %v881 = vmul.f32 %v708, %v873
  %v882 = vmul.f32 %v709, %v873
  %s883 = scalar_lea.vmem %s5, 64
  %884 = vst [vmem:[%s883] sm:$0xff] %v875
  %885 = vst [vmem:[%s883 + $0x8] sm:$0xff] %v876
  %886 = vst [vmem:[%s883 + $0x10] sm:$0xff] %v877
  %887 = vst [vmem:[%s883 + $0x18] sm:$0xff] %v878
  %888 = vst [vmem:[%s883 + $0x20] sm:$0xff] %v879
  %889 = vst [vmem:[%s883 + $0x28] sm:$0xff] %v880
  %890 = vst [vmem:[%s883 + $0x30] sm:$0xff] %v881
  %891 = vst [vmem:[%s883 + $0x38] sm:$0xff] %v882
  // Predicated region
  $region22: #{se_forward.1} parent=0 // pred_check
    _
  $region23: #{se_forward.1} parent=0 // pred_check_branch
    %893 = sbr.rel (0) target = $region25
  $region24: #{se_forward.1} parent=0 // pred_region
    _
  $region25: #{se_forward.1} parent=0 // pred_fallthru
    _
  // Predicated region
  $region26: #{se_forward.1} parent=0 // pred_check
    _
  $region27: #{se_forward.1} parent=0 // pred_check_branch
    %895 = sbr.rel (0) target = $region29
  $region28: #{se_forward.1} parent=0 // pred_region
    _
  $region29: #{se_forward.1} parent=0 // pred_fallthru
    _

</llo_original>
